<compile_context>
chip_gen: v7x
topology: tpu7x:2x2x1
jax: 0.10.0
libtpu: 0.0.40
codegen_flags: <defaults>
</compile_context>

<pallas_src>
import numpy as np
import jax
import jax.numpy as jnp
from jax import lax
from jax.experimental import pallas as pl
from jax.experimental.pallas import tpu as pltpu

B, C, H, W = 2, 32, 16, 16          # channels must be >= reduction (16)
RED = 16
CR = C // RED                        # reduced channels (= 2)
PAD = 4                              # dilation = padding = 4, kernel = 3
BN_EPS = 1e-5


# ----------------------------------------------------------------------------
# Small runtime probe: does pltpu.roll follow np.roll's sign convention
# (out[i] = x[(i - shift) % n])?  Keeps the dilated-conv taps correct
# independent of the rotation direction of the underlying primitive.
# ----------------------------------------------------------------------------
def _roll_matches_np_roll():
    def probe(x_ref, o_ref):
        o_ref[...] = pltpu.roll(x_ref[...], 1, axis=1)

    x = jnp.arange(8 * 128, dtype=jnp.float32).reshape(8, 128)
    out = pl.pallas_call(
        probe, out_shape=jax.ShapeDtypeStruct((8, 128), jnp.float32))(x)
    return bool(out[0, 0] == x[0, 127])


# ----------------------------------------------------------------------------
# Pallas kernel (one batch element per grid step, lane-dense (C, H*W) layout)
# ----------------------------------------------------------------------------
def make_bam_kernel(h, w, pad, np_roll_convention):
    hw = h * w

    def kernel(x_ref,
               cg_w1, cg_b1, cg_w2, cg_b2,
               sg_w1, sg_b1,
               sg_w2a, sg_b2a,
               sg_w2b, sg_b2b,
               sg_w3, sg_b3,
               out_ref, stk_ref):
        x = x_ref[0]                                             # (C, HW)

        # ---------------- Channel gate (BN1d folded into cg_w2/cg_b2) -------
        pooled = jnp.sum(x, axis=1, keepdims=True) * (1.0 / hw)          # (C, 1)
        hid = jnp.dot(cg_w1[...], pooled,
                      preferred_element_type=jnp.float32) + cg_b1[...]   # (CR, 1)
        hid = jnp.maximum(hid, 0.0)
        ch = jnp.dot(cg_w2[...], hid,
                     preferred_element_type=jnp.float32) + cg_b2[...]    # (C, 1)

        # ---------------- Spatial gate --------------------------------------
        # conv1 (1x1): (CR, C) @ (C, HW) -> lane-dense (CR, HW)
        y = jnp.dot(sg_w1[...], x,
                    preferred_element_type=jnp.float32) + sg_b1[...]     # (CR, HW)
        cr = y.shape[0]

        lane = lax.broadcasted_iota(jnp.int32, (cr, hw), 1)
        wi = lane % w
        hi = lane // w

        def dilated_block(y_in, w_ref, b_ref):
            # 3x3 conv, dilation = padding = pad, as ONE im2col matmul over
            # 9 rolled + masked taps stacked in a lane-dense scratch.
            for k in range(9):
                dh = (k // 3 - 1) * pad
                dw = (k % 3 - 1) * pad
                s = dh * w + dw
                if s == 0:
                    tap = y_in
                else:
                    amt = (-s) % hw if np_roll_convention else s % hw
                    tap = pltpu.roll(y_in, amt, axis=1)
                cond = None
                if dh > 0:
                    cond = hi < (h - dh)
                elif dh < 0:
                    cond = hi >= (-dh)
                if dw > 0:
                    c2 = wi < (w - dw)
                    cond = c2 if cond is None else cond & c2
                elif dw < 0:
                    c2 = wi >= (-dw)
                    cond = c2 if cond is None else cond & c2
                if cond is not None:
                    tap = jnp.where(cond, tap, 0.0)
                stk_ref[k * cr:(k + 1) * cr, :] = tap
            z = jnp.dot(w_ref[...], stk_ref[...],
                        preferred_element_type=jnp.float32) + b_ref[...]  # (CR, HW)
            return jnp.maximum(z, 0.0)               # bias + BN already folded

        y = dilated_block(y, sg_w2a, sg_b2a)
        y = dilated_block(y, sg_w2b, sg_b2b)

        # conv3 (1x1 -> 1 channel) with BN2d(1) folded into sg_w3/sg_b3
        sp = jnp.dot(sg_w3[...], y,
                     preferred_element_type=jnp.float32) + sg_b3[...]    # (1, HW)

        # ---------------- Combine --------------------------------------------
        attn = jax.nn.sigmoid(ch + sp)                           # (C, HW)
        out_ref[0] = x * (1.0 + attn)

    return kernel


# ----------------------------------------------------------------------------
# Wrapper (no transposes; only free reshapes at the boundary)
# ----------------------------------------------------------------------------
def bam_pallas(x_nchw, p, np_roll_convention=True):
    b, c, h, w = x_nchw.shape
    hw = h * w
    cr = p["sg_w1"].shape[0]
    x_flat = x_nchw.reshape(b, c, hw)

    inputs = (x_flat,
              p["cg_w1"], p["cg_b1"], p["cg_w2"], p["cg_b2"],
              p["sg_w1"], p["sg_b1"],
              p["sg_w2a"], p["sg_b2a"],
              p["sg_w2b"], p["sg_b2b"],
              p["sg_w3"], p["sg_b3"])

    def full_spec(a):
        nd = a.ndim
        return pl.BlockSpec(a.shape, lambda i, nd=nd: (0,) * nd)

    in_specs = ([pl.BlockSpec((1, c, hw), lambda i: (i, 0, 0))]
                + [full_spec(a) for a in inputs[1:]])

    out_flat = pl.pallas_call(
        make_bam_kernel(h, w, PAD, np_roll_convention),
        grid=(b,),
        out_shape=jax.ShapeDtypeStruct((b, c, hw), jnp.float32),
        in_specs=in_specs,
        out_specs=pl.BlockSpec((1, c, hw), lambda i: (i, 0, 0)),
        scratch_shapes=[pltpu.VMEM((9 * cr, hw), jnp.float32)],
        input_output_aliases={0: 0},
        compiler_params=pltpu.CompilerParams(
            dimension_semantics=("parallel",)),
    )(*inputs)

    return out_flat.reshape(b, c, h, w)


# ----------------------------------------------------------------------------
# Deterministic parameter construction (bias + eval-mode BN folded)
# ----------------------------------------------------------------------------
def init_params(key, c, reduction=RED):
    cr = c // reduction
    ks = jax.random.split(key, 12)

    def rnd(k, shape, scale=0.1):
        return scale * jax.random.normal(k, shape, jnp.float32)

    raw = dict(
        cg_lin1_w=rnd(ks[0], (cr, c)),   cg_lin1_b=rnd(ks[1], (cr,)),
        cg_lin2_w=rnd(ks[2], (c, cr)),   cg_lin2_b=rnd(ks[3], (c,)),
        sg_c1_w=rnd(ks[4], (cr, c, 1, 1)), sg_c1_b=rnd(ks[5], (cr,)),
        sg_c2a_w=rnd(ks[6], (cr, cr, 3, 3)), sg_c2a_b=rnd(ks[7], (cr,)),
        sg_c2b_w=rnd(ks[8], (cr, cr, 3, 3)), sg_c2b_b=rnd(ks[9], (cr,)),
        sg_c3_w=rnd(ks[10], (1, cr, 1, 1)), sg_c3_b=rnd(ks[11], (1,)),
    )

    # Eval-mode BatchNorm with fresh-init stats, folded into scale/shift.
    def bn_fold(n):
        gamma = jnp.ones((n,), jnp.float32)
        beta = jnp.zeros((n,), jnp.float32)
        mean = jnp.zeros((n,), jnp.float32)
        var = jnp.ones((n,), jnp.float32)
        s = gamma / jnp.sqrt(var + BN_EPS)
        return s, beta - mean * s

    s1d, t1d = bn_fold(c)     # BatchNorm1d(C)
    s2a, t2a = bn_fold(cr)    # BatchNorm2d(CR)
    s2b, t2b = bn_fold(cr)    # BatchNorm2d(CR)
    s3, t3 = bn_fold(1)       # BatchNorm2d(1)
    bn = dict(s1d=s1d, t1d=t1d, s2a=s2a, t2a=t2a, s2b=s2b, t2b=t2b, s3=s3, t3=t3)

    def fold_dilated(wt, bias, s, t):
        cr_out, cr_in = wt.shape[0], wt.shape[1]
        # Wfold[co, (kh*3+kw)*cr_in + ci] = wt[co, ci, kh, kw] * s[co]
        wf = jnp.transpose(wt, (0, 2, 3, 1)).reshape(cr_out, 9 * cr_in) * s[:, None]
        bf = (bias * s + t)[:, None]
        return wf, bf

    w2a, b2a = fold_dilated(raw["sg_c2a_w"], raw["sg_c2a_b"], s2a, t2a)
    w2b, b2b = fold_dilated(raw["sg_c2b_w"], raw["sg_c2b_b"], s2b, t2b)

    params = dict(
        cg_w1=raw["cg_lin1_w"],                          # (CR, C)
        cg_b1=raw["cg_lin1_b"][:, None],                 # (CR, 1)
        cg_w2=raw["cg_lin2_w"] * s1d[:, None],           # (C, CR)  BN1d folded
        cg_b2=(raw["cg_lin2_b"] * s1d + t1d)[:, None],   # (C, 1)
        sg_w1=raw["sg_c1_w"][:, :, 0, 0],                # (CR, C)
        sg_b1=raw["sg_c1_b"][:, None],                   # (CR, 1)
        sg_w2a=w2a, sg_b2a=b2a,                          # (CR, 9*CR), (CR, 1)
        sg_w2b=w2b, sg_b2b=b2b,
        sg_w3=raw["sg_c3_w"][:, :, 0, 0] * s3[:, None],  # (1, CR)  BN2d(1) folded
        sg_b3=(raw["sg_c3_b"] * s3 + t3)[:, None],       # (1, 1)
    )
    return raw, bn, params


# ----------------------------------------------------------------------------
# Pure-JAX reference (NCHW, lax convs) for a correctness check
# ----------------------------------------------------------------------------
def bam_reference(x, raw, bn):
    hp = lax.Precision.HIGHEST
    dn = ("NCHW", "OIHW", "NCHW")

    pooled = jnp.mean(x, axis=(2, 3))
    y = jax.nn.relu(jnp.dot(pooled, raw["cg_lin1_w"].T, precision=hp) + raw["cg_lin1_b"])
    y = jnp.dot(y, raw["cg_lin2_w"].T, precision=hp) + raw["cg_lin2_b"]
    y = y * bn["s1d"] + bn["t1d"]
    ch = y[:, :, None, None]

    z = lax.conv_general_dilated(x, raw["sg_c1_w"], (1, 1), "VALID",
                                 dimension_numbers=dn, precision=hp)
    z = z + raw["sg_c1_b"][None, :, None, None]
    for wk, bk, sk, tk in (("sg_c2a_w", "sg_c2a_b", "s2a", "t2a"),
                           ("sg_c2b_w", "sg_c2b_b", "s2b", "t2b")):
        z = lax.conv_general_dilated(z, raw[wk], (1, 1), [(PAD, PAD), (PAD, PAD)],
                                     rhs_dilation=(PAD, PAD),
                                     dimension_numbers=dn, precision=hp)
        z = z + raw[bk][None, :, None, None]
        z = z * bn[sk][None, :, None, None] + bn[tk][None, :, None, None]
        z = jax.nn.relu(z)
    z = lax.conv_general_dilated(z, raw["sg_c3_w"], (1, 1), "VALID",
                                 dimension_numbers=dn, precision=hp)
    z = z + raw["sg_c3_b"][None, :, None, None]
    z = z * bn["s3"][None, :, None, None] + bn["t3"][None, :, None, None]

    attn = jax.nn.sigmoid(ch + z)
    return x + x * attn


if __name__ == "__main__":
    key = jax.random.PRNGKey(0)
    kx, kp = jax.random.split(key)
    x = jax.random.normal(kx, (B, C, H, W), jnp.float32)

    raw, bn, params = init_params(kp, C, RED)
    np_roll = _roll_matches_np_roll()

    fwd = jax.jit(lambda xx: bam_pallas(xx, params, np_roll))
    out = jax.block_until_ready(fwd(x))

    ref = bam_reference(x, raw, bn)
    np.testing.assert_allclose(np.asarray(out), np.asarray(ref),
                               rtol=5e-3, atol=5e-3)
    print("KERNEL_OK")
</pallas_src>

<mosaic_0001>
module attributes {stable_mosaic.version = 11 : i64} {
  func.func @probe(%arg0: memref<8x128xf32, #tpu.memory_space<vmem>>, %arg1: memref<8x128xf32, #tpu.memory_space<vmem>>) attributes {dimension_semantics = [], scalar_prefetch = 0 : i64, scratch_operands = 0 : i64, tpu.core_type = #tpu.core_type<tc>} {
    %c0 = arith.constant 0 : index
    %c0_0 = arith.constant 0 : index
    %0 = vector.load %arg0[%c0, %c0_0] : memref<8x128xf32, #tpu.memory_space<vmem>>, vector<8x128xf32>
    %c1_i32 = arith.constant 1 : i32
    %1 = tpu.dynamic_rotate %0 by %c1_i32 dim 1 : vector<8x128xf32>, i32 -> vector<8x128xf32>
    %c0_1 = arith.constant 0 : index
    %c0_2 = arith.constant 0 : index
    %2 = vector.load %arg1[%c0_1, %c0_2] : memref<8x128xf32, #tpu.memory_space<vmem>>, vector<8x128xf32>
    tpu.vector_store %arg1[%c0_1, %c0_2], %1 {strides = array<i32>} : memref<8x128xf32, #tpu.memory_space<vmem>>, vector<8x128xf32>,
    return
  }
}

</mosaic_0001>

<llo_original>
// kernel: tpu_custom_call.1
$region0: #{tpu_custom_call.1}
  #allocation0 [shape = 'u32[]', space=smem, size = 0x4, offset = 0x4, fixed_abs, tag = 'smem constant byte address 0x4 - core index']
  #allocation1 [shape = 'u32[144,128]{1,0:T(1,128)}', space=vmem, size = 0x12000, scoped, tag = 'internal scratch']
  %s0 = inlined_call_operand.hbm [shape: f32[8,128], index: 0, kind: input, shape index: {}]
  %s1 = inlined_call_operand.hbm [shape: f32[8,128], index: 1, kind: output, shape index: {}]
  %s2 = sld [smem:[#allocation0]]
  $region18: #{tpu_custom_call.1} parent=0
    _
  %s4 = ssub.s32 1, %s2
  %s5 = scalar_select 0, %s4, %s2
  $region1: #{tpu_custom_call.1} parent=0
    #allocation2 [shape = 'u8[4096]{0}', space=vmem, size = 0x1000, scoped, tag = 'input window, operand 0, single buffered']
    #allocation3 [shape = 's32[1]{0}', space=sflag, size = 0x4, scoped, tag = 'scoped memory for tpu_custom_call.1']
    #allocation4 [shape = 's32[1]{0}', space=sflag, size = 0x4, scoped, tag = 'scoped memory for tpu_custom_call.1']
    #allocation5 [shape = 'u8[4096]{0}', space=vmem, size = 0x1000, scoped, tag = 'output window, operand 0, single buffered']
    %6 = vsyncpa [#allocation3], 0
    %7 = vsyncpa [#allocation4], 0
    // Predicated region
    $region2: #{tpu_custom_call.1} parent=1 // pred_check
      _
    $region3: #{tpu_custom_call.1} parent=1 // pred_check_branch
      %9 = sbr.rel (0) target = $region5
    $region4: #{tpu_custom_call.1} parent=1 // pred_region
      %s11 = ssub.s32 128, 128
      %12 = vsyncadd [#allocation3], %s11
      %s14 = sshll.u32 [#allocation2], 4
      %s15 = int_to_ptr.vmem [resolvable:$true] %s14
      %17 = dma.hbm_to_vmem [thread:$0]  %s0, 128, %s15, [#allocation3]
    $region5: #{tpu_custom_call.1} parent=1 // pred_fallthru
      _
    // Predicated region
    $region6: #{tpu_custom_call.1} parent=1 // pred_check
      _
    $region7: #{tpu_custom_call.1} parent=1 // pred_check_branch
      %19 = sbr.rel (0) target = $region9
    $region8: #{tpu_custom_call.1} parent=1 // pred_region
      %20 = dma.done [#allocation3], 128
    $region9: #{tpu_custom_call.1} parent=1 // pred_fallthru
      _
    %v21 = vld [vmem:[#allocation2] sm:$0xff]
    %22 = vrot.lane.b32.xlu0 %v21, 1
    %v23 = vpop.permute.xlu0 %22
    %24 = vst [vmem:[#allocation5] sm:$0xff] %v23
    // Predicated region
    $region10: #{tpu_custom_call.1} parent=1 // pred_check
      _
    $region11: #{tpu_custom_call.1} parent=1 // pred_check_branch
      %26 = sbr.rel (0) target = $region13
    $region12: #{tpu_custom_call.1} parent=1 // pred_region
      %s28 = ssub.s32 128, 128
      %29 = vsyncadd [#allocation4], %s28
      %s31 = sshll.u32 [#allocation5], 4
      %s32 = int_to_ptr.vmem [resolvable:$true] %s31
      %34 = dma.vmem_to_hbm [thread:$0]  %s32, 128, %s1, [#allocation4]
    $region13: #{tpu_custom_call.1} parent=1 // pred_fallthru
      _
    // Predicated region
    $region14: #{tpu_custom_call.1} parent=1 // pred_check
      _
    $region15: #{tpu_custom_call.1} parent=1 // pred_check_branch
      %36 = sbr.rel (0) target = $region17
    $region16: #{tpu_custom_call.1} parent=1 // pred_region
      %37 = dma.done [#allocation4], 128
    $region17: #{tpu_custom_call.1} parent=1 // pred_fallthru
      _
    %38 = vsyncpa [#allocation3], 1
    %39 = vsyncpa [#allocation4], 1

</llo_original>
